<compile_context>
chip_gen: v7x
topology: tpu7x:2x2x1
jax: 0.10.0
libtpu: 0.0.40
codegen_flags: <defaults>
</compile_context>

<pallas_src>
import jax
import jax.numpy as jnp
from jax.experimental import pallas as pl
from jax.experimental.pallas import tpu as pltpu


def _conv_band_kernel(x_ref, w_ref, b_ref, o_ref):
    # x_ref: (Hp_pad, W*Cin)        H-padded image, VMEM-resident across band/col axes
    # w_ref: (KH, W*Cin, t_wcout)   banded weight tile (width conv + channel contraction)
    # b_ref: (1, t_wcout)           lane-dense bias row (f32)
    # o_ref: (tH, t_wcout)          one lane-dense output row-band tile
    tH, t_wcout = o_ref.shape
    KH = w_ref.shape[0]
    h = pl.program_id(2)
    row0 = pl.multiple_of(h * tH, tH)

    # Single 8-row-aligned window load per band; the kh-shifted row views below are
    # static sublane shifts of the in-register window (XLU), not extra vld sequences.
    win = x_ref[pl.ds(row0, tH + 8), :]

    # Bias folded into the accumulator init (saves a full-tile VPU add at the end).
    acc = jnp.broadcast_to(b_ref[...], (tH, t_wcout)).astype(jnp.float32)
    for kh in range(KH):                          # static unroll over kernel rows
        rows = win[kh:kh + tH, :]                 # static sublane-shifted view
        acc = acc + jnp.dot(rows, w_ref[kh], preferred_element_type=jnp.float32)
    o_ref[...] = acc.astype(o_ref.dtype)


def _col_tile(wcout):
    """Output-column (lane) tile: a multiple of 128, preferring 256/512 for v6e/v7x.
    Falls back to the full extent when wcout is not 128-aligned."""
    if wcout % 128 != 0:
        return wcout
    for t in (512, 384, 256, 128):
        if wcout % t == 0:
            return t
    return wcout


def _band_rows(h_out, t_wcout, n_batch):
    """Largest 8-aligned row band dividing H_out (up to 128), capped so the f32
    accumulator (tH x t_wcout) stays within ~16 vregs; a single band is allowed when
    the batch axis alone already provides >= 2 grid steps for pipelining."""
    cap = max(8, (128 * 128) // max(t_wcout, 1))
    for t in (128, 64, 32, 16, 8):
        if t <= cap and h_out % t == 0 and (n_batch >= 2 or h_out // t >= 2):
            return t
    return h_out


def _make_banded_weight(weight_oihw, w_in, w_out, padding):
    """Build W_band[kh, win*Cin+ci, wout*Cout+co] = weight[co, ci, kh, win-wout+p]
    (zero when the tap falls outside the kernel, which also implements the width
    zero-padding)."""
    Cout, Cin, KH, KW = weight_oihw.shape
    w_khwio = jnp.transpose(weight_oihw, (2, 3, 1, 0))           # (KH, KW, Cin, Cout)
    win = jnp.arange(w_in)
    wout = jnp.arange(w_out)
    kw = win[:, None] - wout[None, :] + padding                  # (W, W_out)
    valid = (kw >= 0) & (kw < KW)
    kw_c = jnp.clip(kw, 0, KW - 1)
    wb = w_khwio[:, kw_c]                                        # (KH, W, W_out, Cin, Cout)
    wb = jnp.where(valid[None, :, :, None, None], wb, 0.0)
    wb = wb.transpose(0, 1, 3, 2, 4)                             # (KH, W, Cin, W_out, Cout)
    return wb.reshape(KH, w_in * Cin, w_out * Cout)


def conv_grad_forward(x_nchw, weight_oihw, bias, padding=1, compute_dtype=None):
    """Forward of ConvGrad: y = conv2d(x, weight, bias, stride=1, padding=padding).

    x_nchw:        (N, Cin, H, W)
    weight_oihw:   (Cout, Cin, KH, KW)   -- PyTorch layout
    bias:          (Cout,)
    compute_dtype: None -> use x dtype (faithful f32);  jnp.bfloat16 -> bf16 inputs /
                   weights with f32 MXU accumulation (v6e/v7x fast path).
    returns:       (N, Cout, H_out, W_out) in x's dtype.
    """
    N, Cin, H, W = x_nchw.shape
    Cout, _, KH, KW = weight_oihw.shape
    H_out = H + 2 * padding - KH + 1
    W_out = W + 2 * padding - KW + 1
    wcin = W * Cin
    wcout = W_out * Cout
    cdt = x_nchw.dtype if compute_dtype is None else compute_dtype

    t_wcout = _col_tile(wcout)
    n_ctiles = wcout // t_wcout
    tH = _band_rows(H_out, t_wcout, N)
    n_bands = pl.cdiv(H_out, tH)
    # Pad the H axis so every in-kernel (tH+8)-row window load is 8-row aligned and
    # in bounds (the extra rows are zeros, part of the halo).
    hp_pad = max(n_bands * tH + 8, H + 2 * padding)

    # NCHW -> (N, H, W*Cin); pad H top by `padding`, bottom to hp_pad.  The width halo
    # is folded into the banded weight, so no W padding is needed.
    x_flat = jnp.transpose(x_nchw, (0, 2, 3, 1)).reshape(N, H, wcin)
    x_flat = jnp.pad(x_flat, ((0, 0), (padding, hp_pad - padding - H), (0, 0)))
    x_flat = x_flat.astype(cdt)

    w_band = _make_banded_weight(weight_oihw, W, W_out, padding).astype(cdt)
    b_flat = jnp.tile(bias, W_out).reshape(1, wcout).astype(jnp.float32)

    # Explicit VMEM budget (double-buffered blocks + headroom), clamped to the 32 MiB
    # scoped default so it is safe on v5e/v6e (128 MiB) and v7x (64 MiB) alike.
    isz = jnp.dtype(cdt).itemsize
    blk_bytes = (hp_pad * wcin * isz            # resident image (lane-padded <= 2x)
                 + KH * wcin * t_wcout * isz    # banded weight tile
                 + t_wcout * 4                  # bias row
                 + tH * t_wcout * x_nchw.dtype.itemsize)
    vmem_limit = int(min(max(4 * blk_bytes, 8 << 20), 32 << 20))

    out_flat = pl.pallas_call(
        _conv_band_kernel,
        out_shape=jax.ShapeDtypeStruct((N, H_out, wcout), x_nchw.dtype),
        grid_spec=pltpu.PrefetchScalarGridSpec(
            num_scalar_prefetch=0,
            grid=(N, n_ctiles, n_bands),
            in_specs=[
                # Full (H-padded) image per batch element; index_map ignores the band
                # and column axes so the block stays resident in VMEM across them.
                pl.BlockSpec((None, hp_pad, wcin), lambda n, c, h: (n, 0, 0)),
                # Banded weight: one column tile, resident across the (inner) band axis.
                pl.BlockSpec((KH, wcin, t_wcout), lambda n, c, h: (0, 0, c)),
                pl.BlockSpec((1, t_wcout), lambda n, c, h: (0, c)),
            ],
            out_specs=pl.BlockSpec((None, tH, t_wcout), lambda n, c, h: (n, h, c)),
        ),
        compiler_params=pltpu.CompilerParams(
            # Only N is "parallel": a megacore/2-TC split lands on the batch axis, so
            # each core fetches each image exactly once (preserves input residency).
            dimension_semantics=("parallel", "arbitrary", "arbitrary"),
            vmem_limit_bytes=vmem_limit),
    )(x_flat, w_band, b_flat)

    # (N, H_out, W_out*Cout) -> NCHW
    return jnp.transpose(out_flat.reshape(N, H_out, W_out, Cout), (0, 3, 1, 2))


if __name__ == "__main__":
    # Module config (ConvGrad(in_channels, out_channels, kernel_size=3, padding=1))
    in_channels, out_channels = 4, 8
    kernel_size, padding = 3, 1
    N, H, W = 2, 16, 16

    key = jax.random.PRNGKey(0)
    kx, kw, kb = jax.random.split(key, 3)

    x = jax.random.normal(kx, (N, in_channels, H, W), dtype=jnp.float32)

    # Deterministic parameter init (matches nn.Conv2d's uniform bound).
    fan_in = in_channels * kernel_size * kernel_size
    bound = 1.0 / (fan_in ** 0.5)
    weight = jax.random.uniform(
        kw, (out_channels, in_channels, kernel_size, kernel_size),
        minval=-bound, maxval=bound, dtype=jnp.float32)
    bias = jax.random.uniform(
        kb, (out_channels,), minval=-bound, maxval=bound, dtype=jnp.float32)

    # Reference (plain XLA conv).
    y_ref = jax.lax.conv_general_dilated(
        x, weight, window_strides=(1, 1),
        padding=((padding, padding), (padding, padding)),
        dimension_numbers=("NCHW", "OIHW", "NCHW"),
    ) + bias[None, :, None, None]

    # 1) Faithful f32 path (module numerics).
    y_f32 = jax.block_until_ready(conv_grad_forward(x, weight, bias, padding=padding))
    assert y_f32.shape == (N, out_channels, H, W)
    assert jnp.allclose(y_f32, y_ref, atol=1e-4, rtol=1e-4)

    # 2) bf16-input / f32-accumulate fast path (v6e / v7x MXU peak); output stays f32.
    y_bf16 = jax.block_until_ready(
        conv_grad_forward(x, weight, bias, padding=padding, compute_dtype=jnp.bfloat16))
    assert y_bf16.dtype == y_ref.dtype
    assert jnp.allclose(y_bf16, y_ref, atol=5e-2, rtol=5e-2)

    print("KERNEL_OK")
</pallas_src>

<mosaic_0001>
module attributes {stable_mosaic.version = 11 : i64} {
  func.func @_conv_band_kernel(%arg0: i32, %arg1: i32, %arg2: i32, %arg3: memref<1x24x64xf32, #tpu.memory_space<vmem>>, %arg4: memref<3x64x128xf32, #tpu.memory_space<vmem>>, %arg5: memref<1x128xf32, #tpu.memory_space<vmem>>, %arg6: memref<1x16x128xf32, #tpu.memory_space<vmem>>) attributes {dimension_semantics = [#tpu.dimension_semantics<parallel>, #tpu.dimension_semantics<arbitrary>, #tpu.dimension_semantics<arbitrary>], iteration_bounds = array<i64: 2, 1, 1>, scalar_prefetch = 0 : i64, scratch_operands = 0 : i64, tpu.core_type = #tpu.core_type<tc>, window_params = [{transform_indices = @transform_0, window_bounds = array<i64: 1, 24, 64>}, {transform_indices = @transform_1, window_bounds = array<i64: 3, 64, 128>}, {transform_indices = @transform_2, window_bounds = array<i64: 1, 128>}, {transform_indices = @transform_3, window_bounds = array<i64: 1, 16, 128>}]} {
    %c16_i32 = arith.constant 16 : i32
    %0 = arith.muli %arg2, %c16_i32 : i32
    %1 = tpu.assume_multiple %0, 16 : i32
    %c0 = arith.constant 0 : index
    %2 = arith.index_cast %1 : i32 to index
    %c0_0 = arith.constant 0 : index
    %3 = vector.load %arg3[%c0, %2, %c0_0] : memref<1x24x64xf32, #tpu.memory_space<vmem>>, vector<1x24x64xf32>
    %4 = vector.shape_cast %3 : vector<1x24x64xf32> to vector<24x64xf32>
    %c0_1 = arith.constant 0 : index
    %c0_2 = arith.constant 0 : index
    %5 = vector.load %arg5[%c0_1, %c0_2] : memref<1x128xf32, #tpu.memory_space<vmem>>, vector<1x128xf32>
    %6 = vector.shape_cast %5 : vector<1x128xf32> to vector<1x128xf32>
    %7 = vector.broadcast %6 : vector<1x128xf32> to vector<16x128xf32>
    %8 = vector.extract_strided_slice %4 {offsets = [0, 0], sizes = [16, 64], strides = [1, 1]} : vector<24x64xf32> to vector<16x64xf32>
    %c0_3 = arith.constant 0 : index
    %c0_4 = arith.constant 0 : index
    %c0_5 = arith.constant 0 : index
    %9 = vector.load %arg4[%c0_3, %c0_4, %c0_5] : memref<3x64x128xf32, #tpu.memory_space<vmem>>, vector<1x64x128xf32>
    %10 = vector.shape_cast %9 : vector<1x64x128xf32> to vector<64x128xf32>
    %cst = arith.constant dense<0.000000e+00> : vector<16x128xf32>
    %11 = tpu.matmul %8, %10, %cst {dimension_numbers = #tpu.dot_dimension_numbers<[1], [0], [0], [1], [0, 0, 1, 1], [], []>} : vector<16x64xf32>, vector<64x128xf32>, vector<16x128xf32> -> vector<16x128xf32>
    %12 = arith.addf %7, %11 : vector<16x128xf32>
    %13 = vector.extract_strided_slice %4 {offsets = [1, 0], sizes = [16, 64], strides = [1, 1]} : vector<24x64xf32> to vector<16x64xf32>
    %c1 = arith.constant 1 : index
    %c0_6 = arith.constant 0 : index
    %c0_7 = arith.constant 0 : index
    %14 = vector.load %arg4[%c1, %c0_6, %c0_7] : memref<3x64x128xf32, #tpu.memory_space<vmem>>, vector<1x64x128xf32>
    %15 = vector.shape_cast %14 : vector<1x64x128xf32> to vector<64x128xf32>
    %cst_8 = arith.constant dense<0.000000e+00> : vector<16x128xf32>
    %16 = tpu.matmul %13, %15, %cst_8 {dimension_numbers = #tpu.dot_dimension_numbers<[1], [0], [0], [1], [0, 0, 1, 1], [], []>} : vector<16x64xf32>, vector<64x128xf32>, vector<16x128xf32> -> vector<16x128xf32>
    %17 = arith.addf %12, %16 : vector<16x128xf32>
    %18 = vector.extract_strided_slice %4 {offsets = [2, 0], sizes = [16, 64], strides = [1, 1]} : vector<24x64xf32> to vector<16x64xf32>
    %c2 = arith.constant 2 : index
    %c0_9 = arith.constant 0 : index
    %c0_10 = arith.constant 0 : index
    %19 = vector.load %arg4[%c2, %c0_9, %c0_10] : memref<3x64x128xf32, #tpu.memory_space<vmem>>, vector<1x64x128xf32>
    %20 = vector.shape_cast %19 : vector<1x64x128xf32> to vector<64x128xf32>
    %cst_11 = arith.constant dense<0.000000e+00> : vector<16x128xf32>
    %21 = tpu.matmul %18, %20, %cst_11 {dimension_numbers = #tpu.dot_dimension_numbers<[1], [0], [0], [1], [0, 0, 1, 1], [], []>} : vector<16x64xf32>, vector<64x128xf32>, vector<16x128xf32> -> vector<16x128xf32>
    %22 = arith.addf %17, %21 : vector<16x128xf32>
    %c0_12 = arith.constant 0 : index
    %c0_13 = arith.constant 0 : index
    %c0_14 = arith.constant 0 : index
    %23 = vector.load %arg6[%c0_12, %c0_13, %c0_14] : memref<1x16x128xf32, #tpu.memory_space<vmem>>, vector<1x16x128xf32>
    %24 = vector.shape_cast %23 : vector<1x16x128xf32> to vector<16x128xf32>
    %25 = vector.shape_cast %22 : vector<16x128xf32> to vector<1x16x128xf32>
    tpu.vector_store %arg6[%c0_12, %c0_13, %c0_14], %25 {strides = array<i32>} : memref<1x16x128xf32, #tpu.memory_space<vmem>>, vector<1x16x128xf32>,
    return
  }
  func.func @transform_0(%arg0: i32, %arg1: i32, %arg2: i32) -> (i32, i32, i32) {
    %c0_i32 = arith.constant 0 : i32
    %c0_i32_0 = arith.constant 0 : i32
    %c0_i32_1 = arith.constant 0 : i32
    return %arg0, %c0_i32, %c0_i32_0 : i32, i32, i32
  }
  func.func @transform_1(%arg0: i32, %arg1: i32, %arg2: i32) -> (i32, i32, i32) {
    %c0_i32 = arith.constant 0 : i32
    %c0_i32_0 = arith.constant 0 : i32
    %c0_i32_1 = arith.constant 0 : i32
    return %c0_i32, %c0_i32_0, %arg1 : i32, i32, i32
  }
  func.func @transform_2(%arg0: i32, %arg1: i32, %arg2: i32) -> (i32, i32) {
    %c0_i32 = arith.constant 0 : i32
    %c0_i32_0 = arith.constant 0 : i32
    return %c0_i32, %arg1 : i32, i32
  }
  func.func @transform_3(%arg0: i32, %arg1: i32, %arg2: i32) -> (i32, i32, i32) {
    %c0_i32 = arith.constant 0 : i32
    return %arg0, %arg2, %arg1 : i32, i32, i32
  }
}

</mosaic_0001>

<llo_original>
// kernel: tpu_custom_call.1
$region0: #{tpu_custom_call.1}
  #allocation0 [shape = 'u32[]', space=smem, size = 0x4, offset = 0x4, fixed_abs, tag = 'smem constant byte address 0x4 - core index']
  #allocation1 [shape = 'u32[144,128]{1,0:T(1,128)}', space=vmem, size = 0x12000, scoped, tag = 'internal scratch']
  %s0 = inlined_call_operand.hbm [shape: f32[2,24,64], index: 0, kind: input, shape index: {}]
  %s1 = inlined_call_operand.hbm [shape: f32[3,64,128], index: 1, kind: input, shape index: {}]
  %s2 = inlined_call_operand.vmem [shape: f32[1,128], index: 2, kind: input, shape index: {}]
  %s3 = inlined_call_operand.hbm [shape: f32[2,16,128], index: 3, kind: output, shape index: {}]
  %s4 = sld [smem:[#allocation0]]
  $region53: #{tpu_custom_call.1} parent=0
    _
  %s6 = ssub.s32 1, %s4
  %s7 = scalar_select 0, %s6, %s4
  $region1: #{tpu_custom_call.1} parent=0
    #allocation2 [shape = 'u8[24576]{0}', space=vmem, size = 0x6000, scoped, tag = 'input window, operand 0']
    #allocation3 [shape = 's32[2]{0}', space=sflag, size = 0x8, scoped, tag = 'scoped memory for tpu_custom_call.1']
    #allocation4 [shape = 's32[2]{0}', space=sflag, size = 0x8, scoped, tag = 'scoped memory for tpu_custom_call.1']
    #allocation5 [shape = 'u8[98304]{0}', space=vmem, size = 0x18000, scoped, tag = 'input window, operand 1, single buffered']
    #allocation6 [shape = 's32[1]{0}', space=sflag, size = 0x4, scoped, tag = 'scoped memory for tpu_custom_call.1']
    #allocation7 [shape = 'u8[16384]{0}', space=vmem, size = 0x4000, scoped, tag = 'output window, operand 0']
    %8 = vsyncpa [#allocation3], 0
    %s9 = scalar_lea.sflag [#allocation3], 1
    %10 = vsyncpa %s9, 0
    %11 = vsyncpa [#allocation6], 0
    %12 = vsyncpa [#allocation4], 0
    %s13 = scalar_lea.sflag [#allocation4], 1
    %14 = vsyncpa %s13, 0
    loop: start=0, step=1, limit=4
    $region2: #{tpu_custom_call.1} parent=1 // loop_pre_header
      _
    $region3: #{tpu_custom_call.1} parent=1 // loop_header
      %s16 = sphi 0, %s20
      %p17 = scmp.ge.s32.totalorder %s16, 4
      %s23 = sphi 0, %s42
      %s24 = sphi 0, %s38
      %s25 = sphi 0, %s34
      %s26 = sphi 0, %s23
      %s27 = sphi 0, %s24
      %s28 = sphi 0, %s25
      %s29 = sphi 0, %s26
      %s30 = sphi 0, %s27
      %s31 = sphi 0, %s28
      %s45 = sphi 0, %s47
      %s48 = sphi 0, %s45
      %s49 = sphi 0, %s48
      %s65 = sphi 0, %s49
      %s71 = sphi 0, %s73
      %s74 = sphi 0, %s71
      %s75 = sphi 0, %s74
      %s91 = sphi 0, %s75
      %s97 = sphi 0, %s99
      %s100 = sphi 0, %s97
      %s101 = sphi 0, %s100
      %s117 = sphi 0, %s101
      %s127 = sphi 0, %s129
      %s130 = sphi 0, %s127
      %s131 = sphi 0, %s130
      %s147 = sphi 0, %s131
    $region4: #{tpu_custom_call.1} parent=1 // loop_header_branch
      %19 = sbr.rel (%p17) target = $region8
    $region5: #{tpu_custom_call.1} parent=1 // loop_body
      %s21 = ssub.s32 %s16, 1
      %s22 = ssub.s32 %s16, 2
      %s32 = sadd.s32 1, %s25
      %p33 = scmp.ge.s32.totalorder %s32, 1
      %s34 = scalar_select %p33, 0, %s32
      %s35 = sadd.s32 1, %s24
      %s36 = scalar_select %p33, %s35, %s24
      %p37 = scmp.ge.s32.totalorder %s36, 1
      %s38 = scalar_select %p37, 0, %s36
      %s39 = sadd.s32 1, %s23
      %s40 = scalar_select %p37, %s39, %s23
      %p41 = scmp.ge.s32.totalorder %s40, 2
      %s42 = scalar_select %p41, 0, %s40
      %s43 = ssub.s32 %s23, %s42
      %p44 = scmp.eq.s32.totalorder %s43, 0
      %s46 = sadd.s32 %s45, 1
      %s47 = scalar_select %p44, %s45, %s46
      %p50 = pneg %p44
      %p51 = scmp.eq.s32.totalorder %s16, 1
      %p52 = por %p50, %p51
      %p53 = scmp.ne.s32.totalorder %s45, %s48
      %p54 = scmp.eq.s32.totalorder %s16, 0
      %p55 = por %p53, %p54
      %p56 = scmp.ne.s32.totalorder %s45, %s48
      %p57 = scmp.eq.s32.totalorder %s21, 1
      %p58 = por %p56, %p57
      %p59 = scmp.ne.s32.totalorder %s48, %s49
      %p60 = scmp.eq.s32.totalorder %s21, 0
      %p61 = por %p59, %p60
      %p62 = scmp.ne.s32.totalorder %s48, %s49
      %p63 = scmp.eq.s32.totalorder %s22, 1
      %p64 = por %p62, %p63
      %p66 = scmp.ne.s32.totalorder %s49, %s65
      %p67 = scmp.eq.s32.totalorder %s22, 0
      %p68 = por %p66, %p67
      %s69 = ssub.s32 %s24, %s38
      %p70 = scmp.eq.s32.totalorder %s69, 0
      %s72 = sadd.s32 %s71, 1
      %s73 = scalar_select %p70, %s71, %s72
      %p76 = pneg %p70
      %p77 = scmp.eq.s32.totalorder %s16, 1
      %p78 = por %p76, %p77
      %p79 = scmp.ne.s32.totalorder %s71, %s74
      %p80 = scmp.eq.s32.totalorder %s16, 0
      %p81 = por %p79, %p80
      %p82 = scmp.ne.s32.totalorder %s71, %s74
      %p83 = scmp.eq.s32.totalorder %s21, 1
      %p84 = por %p82, %p83
      %p85 = scmp.ne.s32.totalorder %s74, %s75
      %p86 = scmp.eq.s32.totalorder %s21, 0
      %p87 = por %p85, %p86
      %p88 = scmp.ne.s32.totalorder %s74, %s75
      %p89 = scmp.eq.s32.totalorder %s22, 1
      %p90 = por %p88, %p89
      %p92 = scmp.ne.s32.totalorder %s75, %s91
      %p93 = scmp.eq.s32.totalorder %s22, 0
      %p94 = por %p92, %p93
      %s95 = ssub.s32 %s24, %s38
      %p96 = scmp.eq.s32.totalorder %s95, 0
      %s98 = sadd.s32 %s97, 1
      %s99 = scalar_select %p96, %s97, %s98
      %p102 = pneg %p96
      %p103 = scmp.eq.s32.totalorder %s16, 1
      %p104 = por %p102, %p103
      %p105 = scmp.ne.s32.totalorder %s97, %s100
      %p106 = scmp.eq.s32.totalorder %s16, 0
      %p107 = por %p105, %p106
      %p108 = scmp.ne.s32.totalorder %s97, %s100
      %p109 = scmp.eq.s32.totalorder %s21, 1
      %p110 = por %p108, %p109
      %p111 = scmp.ne.s32.totalorder %s100, %s101
      %p112 = scmp.eq.s32.totalorder %s21, 0
      %p113 = por %p111, %p112
      %p114 = scmp.ne.s32.totalorder %s100, %s101
      %p115 = scmp.eq.s32.totalorder %s22, 1
      %p116 = por %p114, %p115
      %p118 = scmp.ne.s32.totalorder %s101, %s117
      %p119 = scmp.eq.s32.totalorder %s22, 0
      %p120 = por %p118, %p119
      %s121 = ssub.s32 %s23, %s42
      %s122 = ssub.s32 %s25, %s34
      %s123 = sor.u32 %s121, %s122
      %s124 = ssub.s32 %s24, %s38
      %s125 = sor.u32 %s123, %s124
      %p126 = scmp.eq.s32.totalorder %s125, 0
      %s128 = sadd.s32 %s127, 1
      %s129 = scalar_select %p126, %s127, %s128
      %p132 = pneg %p126
      %p133 = scmp.eq.s32.totalorder %s16, 1
      %p134 = por %p132, %p133
      %p135 = scmp.ne.s32.totalorder %s127, %s130
      %p136 = scmp.eq.s32.totalorder %s16, 0
      %p137 = por %p135, %p136
      %p138 = scmp.ne.s32.totalorder %s127, %s130
      %p139 = scmp.eq.s32.totalorder %s21, 1
      %p140 = por %p138, %p139
      %p141 = scmp.ne.s32.totalorder %s130, %s131
      %p142 = scmp.eq.s32.totalorder %s21, 0
      %p143 = por %p141, %p142
      %p144 = scmp.ne.s32.totalorder %s130, %s131
      %p145 = scmp.eq.s32.totalorder %s22, 1
      %p146 = por %p144, %p145
      %p148 = scmp.ne.s32.totalorder %s131, %s147
      %p149 = scmp.eq.s32.totalorder %s22, 0
      %p150 = por %p148, %p149
      %p151 = scmp.le.s32.totalorder 1, %s16
      %p152 = scmp.lt.s32.totalorder %s16, 3
      %p153 = pnand %p151, %p152
      %p154 = pneg %p153
      // Predicated region
      $region9: #{tpu_custom_call.1} parent=5 // pred_check
        _
      $region10: #{tpu_custom_call.1} parent=5 // pred_check_branch
        %156 = sbr.rel (%p153) target = $region12
      $region11: #{tpu_custom_call.1} parent=5 // pred_region
        %s157 = ssub.s32 %s16, 1
        // Predicated region
        $region13: #{tpu_custom_call.1} parent=11 // pred_check
          %p158 = pneg %p87
        $region14: #{tpu_custom_call.1} parent=11 // pred_check_branch
          %160 = sbr.rel (%p158) target = $region16
        $region15: #{tpu_custom_call.1} parent=11 // pred_region
          %s162 = ssub.s32 3072, 3072
          %163 = vsyncadd [#allocation6], %s162
          %s164 = smul.addr %s27, 128
          %s165 = scalar_lea.hbm %s1, %s164
          %s166 = sshll.u32 [#allocation5], 4
          %s167 = int_to_ptr.vmem [resolvable:$true] %s166
          %172 = dma.hbm_to_vmem [thread:$0]  %s165, 3072, %s167, [#allocation6], 128, 128, 8
        $region16: #{tpu_custom_call.1} parent=11 // pred_fallthru
          _
        // Predicated region
        $region17: #{tpu_custom_call.1} parent=11 // pred_check
          %p173 = pneg %p113
        $region18: #{tpu_custom_call.1} parent=11 // pred_check_branch
          %175 = sbr.rel (%p173) target = $region20
        $region19: #{tpu_custom_call.1} parent=11 // pred_region
          %p176 = scmp.lt.s32.totalorder %s27, 0
          %s177 = scalar_select %p176, %s27, 0
          %s178 = scalar_lea.vmem %s2, %s177
        $region20: #{tpu_custom_call.1} parent=11 // pred_fallthru
          _
      $region12: #{tpu_custom_call.1} parent=5 // pred_fallthru
        _
      %p179 = scmp.lt.s32.totalorder %s16, 2
      // Predicated region
      $region21: #{tpu_custom_call.1} parent=5 // pred_check
        %p180 = pneg %p179
      $region22: #{tpu_custom_call.1} parent=5 // pred_check_branch
        %182 = sbr.rel (%p180) target = $region24
      $region23: #{tpu_custom_call.1} parent=5 // pred_region
        // Predicated region
        $region25: #{tpu_custom_call.1} parent=23 // pred_check
          %p183 = pneg %p55
        $region26: #{tpu_custom_call.1} parent=23 // pred_check_branch
          %185 = sbr.rel (%p183) target = $region28
        $region27: #{tpu_custom_call.1} parent=23 // pred_region
          %s186 = sand.u32 %s45, 1
          %s187 = scalar_lea.sflag [#allocation3], %s186
          %s188 = sand.u32 %s45, 1
          %s189 = smul.addr %s188, 24
          %s190 = scalar_lea.vmem [#allocation2], %s189
          %s192 = ssub.s32 384, 384
          %193 = vsyncadd %s187, %s192
          %s194 = smul.addr %s23, 3
          %s195 = smul.addr %s194, 128
          %s196 = scalar_lea.hbm %s0, %s195
          %s197 = sshll.u32 %s190, 4
          %s198 = int_to_ptr.vmem [resolvable:$true] %s197
          %203 = dma.hbm_to_vmem [thread:$0]  %s196, 384, %s198, %s187, 128, 128, 8
        $region28: #{tpu_custom_call.1} parent=23 // pred_fallthru
          _
      $region24: #{tpu_custom_call.1} parent=5 // pred_fallthru
        _
      %p204 = scmp.le.s32.totalorder 1, %s16
      %p205 = scmp.lt.s32.totalorder %s16, 3
      %p206 = pnand %p204, %p205
      %p207 = pneg %p206
      // Predicated region
      $region29: #{tpu_custom_call.1} parent=5 // pred_check
        _
      $region30: #{tpu_custom_call.1} parent=5 // pred_check_branch
        %209 = sbr.rel (%p206) target = $region32
      $region31: #{tpu_custom_call.1} parent=5 // pred_region
        %s210 = ssub.s32 %s16, 1
        %s211 = sand.u32 %s48, 1
        %s212 = scalar_lea.sflag [#allocation3], %s211
        %s213 = sand.u32 %s48, 1
        %s214 = smul.addr %s213, 24
        %s215 = scalar_lea.vmem [#allocation2], %s214
        // Predicated region
        $region33: #{tpu_custom_call.1} parent=31 // pred_check
          %p216 = pneg %p61
        $region34: #{tpu_custom_call.1} parent=31 // pred_check_branch
          %218 = sbr.rel (%p216) target = $region36
        $region35: #{tpu_custom_call.1} parent=31 // pred_region
          %219 = dma.done %s212, 384
        $region36: #{tpu_custom_call.1} parent=31 // pred_fallthru
          _
        // Predicated region
        $region37: #{tpu_custom_call.1} parent=31 // pred_check
          %p220 = pneg %p87
        $region38: #{tpu_custom_call.1} parent=31 // pred_check_branch
          %222 = sbr.rel (%p220) target = $region40
        $region39: #{tpu_custom_call.1} parent=31 // pred_region
          %223 = dma.done [#allocation6], 3072
        $region40: #{tpu_custom_call.1} parent=31 // pred_fallthru
          _
        %s224 = sand.u32 %s48, 1
        %s225 = scalar_lea.sflag [#allocation3], %s224
        %s226 = sand.u32 %s48, 1
        %s227 = smul.addr %s226, 24
        %s228 = scalar_lea.vmem [#allocation2], %s227
        %p229 = pneg %p61
        %p230 = pneg %p58
        %p231 = pneg %p87
        %p232 = pneg %p84
        %p233 = scmp.lt.s32.totalorder %s27, 0
        %s234 = scalar_select %p233, %s27, 0
        %s235 = scalar_lea.vmem %s2, %s234
        %p236 = pneg %p113
        %p237 = pneg %p110
        %p238 = pneg %p143
        %p239 = pneg %p140
        %s240 = sand.u32 %s130, 1
        %s241 = scalar_lea.sflag [#allocation4], %s240
        %s242 = sand.u32 %s130, 1
        %s243 = smul.addr %s242, 16
        %s244 = scalar_lea.vmem [#allocation7], %s243
        %p245 = scmp.lt.s32.totalorder %s27, 0
        %s246 = scalar_select %p245, %s27, 0
        %s247 = scalar_lea.vmem %s2, %s246
        %s248 = smul.u32 2, %s28
        %s249 = smul.u32 %s28, 16
        %s250 = scalar_lea.vmem %s215, %s249 [#allocation2]
        %v251 = vld [vmem:[%s250] sm:$0xff]
        %v252 = vld [vmem:[%s250 + $0x8] sm:$0xff]
        %v253 = vld [vmem:[%s250 + $0x10] sm:$0xff]
        %v254 = vld [vmem:[%s247] sm:$0x1]
        %v256 = vlaneseq
        %v257 = vshrl.u32 %v256, 7
        %v258 = vsub.s32 0, %v257
        %v259 = vrot.slane %v254, %v258
        %v261 = vld [vmem:[#allocation5] sm:$0xff]
        %v262 = vld [vmem:[#allocation5 + $0x8] sm:$0xff]
        %v263 = vld [vmem:[#allocation5 + $0x10] sm:$0xff]
        %v264 = vld [vmem:[#allocation5 + $0x18] sm:$0xff]
        %v265 = vld [vmem:[#allocation5 + $0x20] sm:$0xff]
        %v266 = vld [vmem:[#allocation5 + $0x28] sm:$0xff]
        %v267 = vld [vmem:[#allocation5 + $0x30] sm:$0xff]
        %v268 = vld [vmem:[#allocation5 + $0x38] sm:$0xff]
        %vm269 = vcmask 523264
        %v271 = vsel %vm269, %v251, 0
        %v274 = vsel %vm269, %v252, 0
        %276 = vmatprep.subr.mxu0 0.0
        %277 = vmatpush1.msra.mxu0 %v261
        %278 = vmatprep.subr.mxu0 0.0
        %279 = vmatpush1.msra.mxu0 %v262
        %280 = vmatprep.subr.mxu0 0.0
        %281 = vmatpush1.msra.mxu0 %v263
        %282 = vmatprep.subr.mxu0 0.0
        %283 = vmatpush1.msra.mxu0 %v264
        %284 = vmatprep.subr.mxu0 0.0
        %285 = vmatpush1.msra.mxu0 %v265
        %286 = vmatprep.subr.mxu0 0.0
        %287 = vmatpush1.msra.mxu0 %v266
        %288 = vmatprep.subr.mxu0 0.0
        %289 = vmatpush1.msra.mxu0 %v267
        %290 = vmatprep.subr.mxu0 0.0
        %291 = vmatpush1.msra.mxu0 %v268
        %292 = vmatprep.subr.mxu0 0.0
        %293 = vmatpush1.msra.mxu0 0.0
        %294 = vmatprep.subr.mxu0 0.0
        %295 = vmatpush1.msra.mxu0 0.0
        %296 = vmatprep.subr.mxu0 0.0
        %297 = vmatpush1.msra.mxu0 0.0
        %298 = vmatprep.subr.mxu0 0.0
        %299 = vmatpush1.msra.mxu0 0.0
        %300 = vmatprep.subr.mxu0 0.0
        %301 = vmatpush1.msra.mxu0 0.0
        %302 = vmatprep.subr.mxu0 0.0
        %303 = vmatpush1.msra.mxu0 0.0
        %304 = vmatprep.subr.mxu0 0.0
        %305 = vmatpush1.msra.mxu0 0.0
        %306 = vmatprep.subr.mxu0 0.0
        %307 = vmatpush1.msra.mxu0 0.0
        %308 = vmatprep.subr.mxu0 0.0
        %309 = vmatpush1.msra.mxu0 0.0
        %310 = vmatprep.subr.mxu0 0.0
        %311 = vmatpush1.msra.mxu0 0.0
        %312 = vmatprep.subr.mxu0 0.0
        %313 = vmatpush1.msra.mxu0 0.0
        %314 = vmatprep.subr.mxu0 0.0
        %315 = vmatpush1.msra.mxu0 0.0
        %316 = vmatprep.subr.mxu0 0.0
        %317 = vmatpush1.msra.mxu0 0.0
        %318 = vmatprep.subr.mxu0 0.0
        %319 = vmatpush1.msra.mxu0 0.0
        %320 = vmatprep.subr.mxu0 0.0
        %321 = vmatpush1.msra.mxu0 0.0
        %322 = vmatprep.subr.mxu0 0.0
        %323 = vmatpush1.msra.mxu0 0.0
        %324 = vmatprep.subr.mxu0 0.0
        %325 = vmatpush1.msra.mxu0 0.0
        %326 = vmatprep.subr.mxu0 0.0
        %327 = vmatpush1.msra.mxu0 0.0
        %328 = vmatprep.subr.mxu0 0.0
        %329 = vmatpush1.msra.mxu0 0.0
        %330 = vmatprep.subr.mxu0 0.0
        %331 = vmatpush1.msra.mxu0 0.0
        %332 = vmatprep.subr.mxu0 0.0
        %333 = vmatpush1.msra.mxu0 0.0
        %334 = vmatprep.subr.mxu0 0.0
        %335 = vmatpush1.msra.mxu0 0.0
        %336 = vmatprep.subr.mxu0 0.0
        %337 = vmatpush1.msra.mxu0 0.0
        %338 = vmatprep.subr.mxu0 0.0
        %339 = vmatpush1.msra.mxu0 0.0
        %340 = vmatprep.mubr.f32.mxu0 0.0
        %341 = vmatmul.mubr.f32.gmra.mrb[0].mxu0 %v271
        %v342 = vpop.f32.mrb[0].mxu0
        %v343 = vadd.f32 0.0, %v342
        %v344 = vpop.f32.mrb[0].mxu0
        %345 = vmatprep.mubr.f32.mxu0 0.0
        %346 = vmatmul.mubr.f32.gmra.mrb[0].mxu0 %v274
        %v347 = vpop.f32.mrb[0].mxu0
        %v348 = vadd.f32 0.0, %v347
        %v349 = vpop.f32.mrb[0].mxu0
        %350 = vdwg.mxu0
        %v351 = vadd.f32 %v259, %v343
        %v352 = vadd.f32 %v259, %v348
        %s353 = scalar_lea.vmem [#allocation5], 64
        %v354 = vld [vmem:[%s353] sm:$0xff]
        %v355 = vld [vmem:[%s353 + $0x8] sm:$0xff]
        %v356 = vld [vmem:[%s353 + $0x10] sm:$0xff]
        %v357 = vld [vmem:[%s353 + $0x18] sm:$0xff]
        %v358 = vld [vmem:[%s353 + $0x20] sm:$0xff]
        %v359 = vld [vmem:[%s353 + $0x28] sm:$0xff]
        %v360 = vld [vmem:[%s353 + $0x30] sm:$0xff]
        %v361 = vld [vmem:[%s353 + $0x38] sm:$0xff]
        %vm363 = vcmask 1046528
        %v364 = vrot.slane %v251, 1
        %v365 = vrot.slane %v252, 1
        %v366 = vsel %vm363, %v364, %v365
        %v367 = vrot.slane %v253, 1
        %v368 = vsel %vm363, %v365, %v367
        %v369 = vsel %vm269, %v366, 0
        %v371 = vsel %vm269, %v368, 0
        %373 = vmatprep.subr.mxu0 0.0
        %374 = vmatpush1.msra.mxu0 %v354
        %375 = vmatprep.subr.mxu0 0.0
        %376 = vmatpush1.msra.mxu0 %v355
        %377 = vmatprep.subr.mxu0 0.0
        %378 = vmatpush1.msra.mxu0 %v356
        %379 = vmatprep.subr.mxu0 0.0
        %380 = vmatpush1.msra.mxu0 %v357
        %381 = vmatprep.subr.mxu0 0.0
        %382 = vmatpush1.msra.mxu0 %v358
        %383 = vmatprep.subr.mxu0 0.0
        %384 = vmatpush1.msra.mxu0 %v359
        %385 = vmatprep.subr.mxu0 0.0
        %386 = vmatpush1.msra.mxu0 %v360
        %387 = vmatprep.subr.mxu0 0.0
        %388 = vmatpush1.msra.mxu0 %v361
        %389 = vmatprep.subr.mxu0 0.0
        %390 = vmatpush1.msra.mxu0 0.0
        %391 = vmatprep.subr.mxu0 0.0
        %392 = vmatpush1.msra.mxu0 0.0
        %393 = vmatprep.subr.mxu0 0.0
        %394 = vmatpush1.msra.mxu0 0.0
        %395 = vmatprep.subr.mxu0 0.0
        %396 = vmatpush1.msra.mxu0 0.0
        %397 = vmatprep.subr.mxu0 0.0
        %398 = vmatpush1.msra.mxu0 0.0
        %399 = vmatprep.subr.mxu0 0.0
        %400 = vmatpush1.msra.mxu0 0.0
        %401 = vmatprep.subr.mxu0 0.0
        %402 = vmatpush1.msra.mxu0 0.0
        %403 = vmatprep.subr.mxu0 0.0
        %404 = vmatpush1.msra.mxu0 0.0
        %405 = vmatprep.subr.mxu0 0.0
        %406 = vmatpush1.msra.mxu0 0.0
        %407 = vmatprep.subr.mxu0 0.0
        %408 = vmatpush1.msra.mxu0 0.0
        %409 = vmatprep.subr.mxu0 0.0
        %410 = vmatpush1.msra.mxu0 0.0
        %411 = vmatprep.subr.mxu0 0.0
        %412 = vmatpush1.msra.mxu0 0.0
        %413 = vmatprep.subr.mxu0 0.0
        %414 = vmatpush1.msra.mxu0 0.0
        %415 = vmatprep.subr.mxu0 0.0
        %416 = vmatpush1.msra.mxu0 0.0
        %417 = vmatprep.subr.mxu0 0.0
        %418 = vmatpush1.msra.mxu0 0.0
        %419 = vmatprep.subr.mxu0 0.0
        %420 = vmatpush1.msra.mxu0 0.0
        %421 = vmatprep.subr.mxu0 0.0
        %422 = vmatpush1.msra.mxu0 0.0
        %423 = vmatprep.subr.mxu0 0.0
        %424 = vmatpush1.msra.mxu0 0.0
        %425 = vmatprep.subr.mxu0 0.0
        %426 = vmatpush1.msra.mxu0 0.0
        %427 = vmatprep.subr.mxu0 0.0
        %428 = vmatpush1.msra.mxu0 0.0
        %429 = vmatprep.subr.mxu0 0.0
        %430 = vmatpush1.msra.mxu0 0.0
        %431 = vmatprep.subr.mxu0 0.0
        %432 = vmatpush1.msra.mxu0 0.0
        %433 = vmatprep.subr.mxu0 0.0
        %434 = vmatpush1.msra.mxu0 0.0
        %435 = vmatprep.subr.mxu0 0.0
        %436 = vmatpush1.msra.mxu0 0.0
        %437 = vmatprep.mubr.f32.mxu0 0.0
        %438 = vmatmul.mubr.f32.gmra.mrb[0].mxu0 %v369
        %v439 = vpop.f32.mrb[0].mxu0
        %v440 = vadd.f32 0.0, %v439
        %v441 = vpop.f32.mrb[0].mxu0
        %442 = vmatprep.mubr.f32.mxu0 0.0
        %443 = vmatmul.mubr.f32.gmra.mrb[0].mxu0 %v371
        %v444 = vpop.f32.mrb[0].mxu0
        %v445 = vadd.f32 0.0, %v444
        %v446 = vpop.f32.mrb[0].mxu0
        %447 = vdwg.mxu0
        %v448 = vadd.f32 %v351, %v440
        %v449 = vadd.f32 %v352, %v445
        %s450 = scalar_lea.vmem [#allocation5], 128
        %v451 = vld [vmem:[%s450] sm:$0xff]
        %v452 = vld [vmem:[%s450 + $0x8] sm:$0xff]
        %v453 = vld [vmem:[%s450 + $0x10] sm:$0xff]
        %v454 = vld [vmem:[%s450 + $0x18] sm:$0xff]
        %v455 = vld [vmem:[%s450 + $0x20] sm:$0xff]
        %v456 = vld [vmem:[%s450 + $0x28] sm:$0xff]
        %v457 = vld [vmem:[%s450 + $0x30] sm:$0xff]
        %v458 = vld [vmem:[%s450 + $0x38] sm:$0xff]
        %vm459 = vcmask 1045504
        %v460 = vrot.slane %v251, 2
        %v461 = vrot.slane %v252, 2
        %v462 = vsel %vm459, %v460, %v461
        %v463 = vrot.slane %v253, 2
        %v464 = vsel %vm459, %v461, %v463
        %v465 = vsel %vm269, %v462, 0
        %v467 = vsel %vm269, %v464, 0
        %469 = vmatprep.subr.mxu0 0.0
        %470 = vmatpush1.msra.mxu0 %v451
        %471 = vmatprep.subr.mxu0 0.0
        %472 = vmatpush1.msra.mxu0 %v452
        %473 = vmatprep.subr.mxu0 0.0
        %474 = vmatpush1.msra.mxu0 %v453
        %475 = vmatprep.subr.mxu0 0.0
        %476 = vmatpush1.msra.mxu0 %v454
        %477 = vmatprep.subr.mxu0 0.0
        %478 = vmatpush1.msra.mxu0 %v455
        %479 = vmatprep.subr.mxu0 0.0
        %480 = vmatpush1.msra.mxu0 %v456
        %481 = vmatprep.subr.mxu0 0.0
        %482 = vmatpush1.msra.mxu0 %v457
        %483 = vmatprep.subr.mxu0 0.0
        %484 = vmatpush1.msra.mxu0 %v458
        %485 = vmatprep.subr.mxu0 0.0
        %486 = vmatpush1.msra.mxu0 0.0
        %487 = vmatprep.subr.mxu0 0.0
        %488 = vmatpush1.msra.mxu0 0.0
        %489 = vmatprep.subr.mxu0 0.0
        %490 = vmatpush1.msra.mxu0 0.0
        %491 = vmatprep.subr.mxu0 0.0
        %492 = vmatpush1.msra.mxu0 0.0
        %493 = vmatprep.subr.mxu0 0.0
        %494 = vmatpush1.msra.mxu0 0.0
        %495 = vmatprep.subr.mxu0 0.0
        %496 = vmatpush1.msra.mxu0 0.0
        %497 = vmatprep.subr.mxu0 0.0
        %498 = vmatpush1.msra.mxu0 0.0
        %499 = vmatprep.subr.mxu0 0.0
        %500 = vmatpush1.msra.mxu0 0.0
        %501 = vmatprep.subr.mxu0 0.0
        %502 = vmatpush1.msra.mxu0 0.0
        %503 = vmatprep.subr.mxu0 0.0
        %504 = vmatpush1.msra.mxu0 0.0
        %505 = vmatprep.subr.mxu0 0.0
        %506 = vmatpush1.msra.mxu0 0.0
        %507 = vmatprep.subr.mxu0 0.0
        %508 = vmatpush1.msra.mxu0 0.0
        %509 = vmatprep.subr.mxu0 0.0
        %510 = vmatpush1.msra.mxu0 0.0
        %511 = vmatprep.subr.mxu0 0.0
        %512 = vmatpush1.msra.mxu0 0.0
        %513 = vmatprep.subr.mxu0 0.0
        %514 = vmatpush1.msra.mxu0 0.0
        %515 = vmatprep.subr.mxu0 0.0
        %516 = vmatpush1.msra.mxu0 0.0
        %517 = vmatprep.subr.mxu0 0.0
        %518 = vmatpush1.msra.mxu0 0.0
        %519 = vmatprep.subr.mxu0 0.0
        %520 = vmatpush1.msra.mxu0 0.0
        %521 = vmatprep.subr.mxu0 0.0
        %522 = vmatpush1.msra.mxu0 0.0
        %523 = vmatprep.subr.mxu0 0.0
        %524 = vmatpush1.msra.mxu0 0.0
        %525 = vmatprep.subr.mxu0 0.0
        %526 = vmatpush1.msra.mxu0 0.0
        %527 = vmatprep.subr.mxu0 0.0
        %528 = vmatpush1.msra.mxu0 0.0
        %529 = vmatprep.subr.mxu0 0.0
        %530 = vmatpush1.msra.mxu0 0.0
        %531 = vmatprep.subr.mxu0 0.0
        %532 = vmatpush1.msra.mxu0 0.0
        %533 = vmatprep.mubr.f32.mxu0 0.0
        %534 = vmatmul.mubr.f32.gmra.mrb[0].mxu0 %v465
        %v535 = vpop.f32.mrb[0].mxu0
        %v536 = vadd.f32 0.0, %v535
        %v537 = vpop.f32.mrb[0].mxu0
        %538 = vmatprep.mubr.f32.mxu0 0.0
        %539 = vmatmul.mubr.f32.gmra.mrb[0].mxu0 %v467
        %v540 = vpop.f32.mrb[0].mxu0
        %v541 = vadd.f32 0.0, %v540
        %v542 = vpop.f32.mrb[0].mxu0
        %543 = vdwg.mxu0
        %v544 = vadd.f32 %v448, %v536
        %v545 = vadd.f32 %v449, %v541
        %546 = vst [vmem:[%s244] sm:$0xff] %v544
        %547 = vst [vmem:[%s244 + $0x8] sm:$0xff] %v545
        %s548 = sand.u32 %s130, 1
        %s549 = scalar_lea.sflag [#allocation4], %s548
        %s550 = sand.u32 %s130, 1
        %s551 = smul.addr %s550, 16
        %s552 = scalar_lea.vmem [#allocation7], %s551
        // Predicated region
        $region41: #{tpu_custom_call.1} parent=31 // pred_check
          %p553 = pneg %p140
        $region42: #{tpu_custom_call.1} parent=31 // pred_check_branch
          %555 = sbr.rel (%p553) target = $region44
        $region43: #{tpu_custom_call.1} parent=31 // pred_region
          %s556 = smul.u32 2, %s28
          %s558 = ssub.s32 256, 256
          %559 = vsyncadd %s549, %s558
          %s560 = sadd.s32 %s27, %s556
          %s561 = smul.addr %s26, 2
          %s562 = sadd.s32 %s560, %s561
          %s563 = smul.addr %s562, 128
          %s564 = scalar_lea.hbm %s3, %s563
          %s565 = sshll.u32 %s552, 4
          %s566 = int_to_ptr.vmem [resolvable:$true] %s565
          %571 = dma.vmem_to_hbm [thread:$0]  %s566, 256, %s564, %s549, 128, 128, 8
        $region44: #{tpu_custom_call.1} parent=31 // pred_fallthru
          _
      $region32: #{tpu_custom_call.1} parent=5 // pred_fallthru
        _
      %p572 = scmp.le.s32.totalorder 2, %s16
      // Predicated region
      $region45: #{tpu_custom_call.1} parent=5 // pred_check
        %p573 = pneg %p572
      $region46: #{tpu_custom_call.1} parent=5 // pred_check_branch
        %575 = sbr.rel (%p573) target = $region48
      $region47: #{tpu_custom_call.1} parent=5 // pred_region
        %s576 = ssub.s32 %s16, 2
        // Predicated region
        $region49: #{tpu_custom_call.1} parent=47 // pred_check
          %p577 = pneg %p146
        $region50: #{tpu_custom_call.1} parent=47 // pred_check_branch
          %579 = sbr.rel (%p577) target = $region52
        $region51: #{tpu_custom_call.1} parent=47 // pred_region
          %s580 = sand.u32 %s131, 1
          %s581 = scalar_lea.sflag [#allocation4], %s580
          %s582 = sand.u32 %s131, 1
          %s583 = smul.addr %s582, 16
          %s584 = scalar_lea.vmem [#allocation7], %s583
          %585 = dma.done %s581, 256
        $region52: #{tpu_custom_call.1} parent=47 // pred_fallthru
          _
      $region48: #{tpu_custom_call.1} parent=5 // pred_fallthru
        _
    $region6: #{tpu_custom_call.1} parent=1 // loop_footer
      %s20 = sadd.s32 1, %s16
    $region7: #{tpu_custom_call.1} parent=1 // loop_footer_branch
      %15 = sbr.rel target = $region3
    $region8: #{tpu_custom_call.1} parent=1 // loop_exit
      _
    %586 = vsyncpa [#allocation3], 1
    %s587 = scalar_lea.sflag [#allocation3], 1
    %588 = vsyncpa %s587, 1
    %589 = vsyncpa [#allocation6], 1
    %590 = vsyncpa [#allocation4], 1
    %s591 = scalar_lea.sflag [#allocation4], 1
    %592 = vsyncpa %s591, 1

</llo_original>
